<compile_context>
chip_gen: v5e
topology: v5e:2x2
jax: 0.10.0
libtpu: 0.0.40
codegen_flags: <defaults>
</compile_context>

<pallas_src>
import math
import functools

import jax
import jax.numpy as jnp
from jax.experimental import pallas as pl
from jax.experimental.pallas import tpu as pltpu


# ---------------------------------------------------------------------------
# Helpers
# ---------------------------------------------------------------------------
def _round_up(x, m):
    return ((x + m - 1) // m) * m


# ---------------------------------------------------------------------------
# Fused Pallas kernel
# ---------------------------------------------------------------------------
def _make_fused_kernel(nlayers, taskcla, seg_offsets):
    """Build the fused MLP kernel body.

    Refs (nlayers == 2): x, w1, b1, w2, b2, wh, bh, out
    Refs (nlayers == 1): x, w1, b1, wh, bh, out
    x: (TB, In) f32, w*: bf16, b*: f32, out: (TB, N_pad) f32.
    """

    def kernel(*refs):
        if nlayers == 2:
            x_ref, w1_ref, b1_ref, w2_ref, b2_ref, wh_ref, bh_ref, o_ref = refs
        else:
            x_ref, w1_ref, b1_ref, wh_ref, bh_ref, o_ref = refs

        # fc1 + ReLU: bf16 MXU inputs, f32 accumulation, f32 epilogue.
        x = x_ref[...].astype(jnp.bfloat16)
        h = jnp.dot(x, w1_ref[...], preferred_element_type=jnp.float32)
        h = jnp.maximum(h + b1_ref[...], 0.0)

        if nlayers == 2:
            h = jnp.dot(h.astype(jnp.bfloat16), w2_ref[...],
                        preferred_element_type=jnp.float32)
            h = jnp.maximum(h + b2_ref[...], 0.0)

        # All task heads fused into one lane-dense matmul.
        z = jnp.dot(h.astype(jnp.bfloat16), wh_ref[...],
                    preferred_element_type=jnp.float32) + bh_ref[...]

        # Per-task log_softmax over static lane segments, implemented with lane
        # masks so every op works on full 128-lane vregs (no narrow slices).
        col = jax.lax.broadcasted_iota(jnp.int32, z.shape, 1)
        out = jnp.zeros_like(z)
        for (_t, n), off in zip(taskcla, seg_offsets):
            mask = (col >= off) & (col < off + n)
            zm = jnp.where(mask, z, -jnp.inf)
            m = jnp.max(zm, axis=-1, keepdims=True)          # finite per row
            e = jnp.exp(zm - m)                              # 0 outside the segment
            lse = m + jnp.log(jnp.sum(e, axis=-1, keepdims=True))
            out = jnp.where(mask, z - lse, out)

        o_ref[...] = out.astype(o_ref.dtype)

    return kernel


# ---------------------------------------------------------------------------
# Forward pass (matches the PyTorch module with qat=False)
# ---------------------------------------------------------------------------
@functools.partial(jax.jit, static_argnames=("nlayers", "taskcla"))
def mlp_forward(x_nchw, params, nlayers, taskcla):
    # TODO(synk): QuantStub/DeQuantStub (qat=True path) has no Pallas equivalent here;
    #             if added later, target fp8 (not int8) so it also runs on v7x's MXU.
    B = x_nchw.shape[0]
    x = x_nchw.reshape(B, -1).astype(jnp.float32)     # x.view(x.size(0), -1)
    In = x.shape[1]
    H = params["fc1_w"].shape[1]

    # Static segment layout of the concatenated heads.
    seg_offsets, off = [], 0
    for _t, n in taskcla:
        seg_offsets.append(off)
        off += n
    total_n = off
    n_pad = _round_up(max(total_n, 128), 128)         # lane-dense output (>=128)

    # Pad batch to a sublane multiple and pick the batch tile.
    tile_b = min(128, _round_up(B, 8))
    b_pad = _round_up(B, tile_b)
    if b_pad != B:
        x = jnp.pad(x, ((0, b_pad - B), (0, 0)))

    # Concatenate + pad the per-task head params: wh (H, n_pad) bf16, bh (1, n_pad) f32.
    wh = jnp.concatenate(
        [params["heads"][t][0].astype(jnp.bfloat16) for t, _n in taskcla], axis=1)
    bh = jnp.concatenate(
        [params["heads"][t][1].astype(jnp.float32) for t, _n in taskcla], axis=1)
    if n_pad != total_n:
        wh = jnp.pad(wh, ((0, 0), (0, n_pad - total_n)))
        bh = jnp.pad(bh, ((0, 0), (0, n_pad - total_n)))

    # Operands + BlockSpecs. Weights use constant index_maps (stay resident);
    # only x / out are tiled along the (parallel) batch grid axis.
    w1 = params["fc1_w"].astype(jnp.bfloat16)
    b1 = params["fc1_b"].astype(jnp.float32)
    operands = [x, w1, b1]
    in_specs = [
        pl.BlockSpec((tile_b, In), lambda i: (i, 0)),
        pl.BlockSpec((In, H), lambda i: (0, 0)),
        pl.BlockSpec((1, H), lambda i: (0, 0)),
    ]
    flops = 2 * b_pad * In * H
    if nlayers == 2:
        w2 = params["fc2_w"].astype(jnp.bfloat16)
        b2 = params["fc2_b"].astype(jnp.float32)
        operands += [w2, b2]
        in_specs += [
            pl.BlockSpec((H, H), lambda i: (0, 0)),
            pl.BlockSpec((1, H), lambda i: (0, 0)),
        ]
        flops += 2 * b_pad * H * H
    operands += [wh, bh]
    in_specs += [
        pl.BlockSpec((H, n_pad), lambda i: (0, 0)),
        pl.BlockSpec((1, n_pad), lambda i: (0, 0)),
    ]
    flops += 2 * b_pad * H * n_pad

    bytes_accessed = sum(int(op.size) * op.dtype.itemsize for op in operands)
    bytes_accessed += b_pad * n_pad * 4

    kernel = _make_fused_kernel(nlayers, tuple(taskcla), tuple(seg_offsets))

    out = pl.pallas_call(
        kernel,
        out_shape=jax.ShapeDtypeStruct((b_pad, n_pad), jnp.float32),
        grid=(b_pad // tile_b,),
        in_specs=in_specs,
        out_specs=pl.BlockSpec((tile_b, n_pad), lambda i: (i, 0)),
        compiler_params=pltpu.CompilerParams(
            dimension_semantics=("parallel",)),
        cost_estimate=pl.CostEstimate(
            flops=int(flops),
            transcendentals=int(b_pad * total_n),
            bytes_accessed=int(bytes_accessed)),
    )(*operands)

    # Slice back to the PyTorch interface: list of (B, n_t) log-probabilities.
    return [out[:B, o:o + n] for (_t, n), o in zip(taskcla, seg_offsets)]


# ---------------------------------------------------------------------------
# Parameter init (mirrors nn.Linear's U(-1/sqrt(fan_in), ..) init)
# ---------------------------------------------------------------------------
def init_linear(key, fan_in, fan_out):
    kw, kb = jax.random.split(key)
    bound = 1.0 / math.sqrt(fan_in)
    # Weights stored pre-transposed (in, out) and in bf16 (MXU-native input dtype;
    # halves the weight DMA). Biases stay f32 for the f32 epilogue.
    w = jax.random.uniform(kw, (fan_in, fan_out), jnp.float32,
                           -bound, bound).astype(jnp.bfloat16)
    b = jax.random.uniform(kb, (1, fan_out), jnp.float32, -bound, bound)
    return w, b


# ---------------------------------------------------------------------------
# Pure-JAX reference (same bf16-input / f32-accumulate numerics as the kernel)
# ---------------------------------------------------------------------------
def ref_forward(x_nchw, params, nlayers, taskcla):
    B = x_nchw.shape[0]
    h = x_nchw.reshape(B, -1).astype(jnp.bfloat16)
    h = jnp.maximum(
        jnp.dot(h, params["fc1_w"], preferred_element_type=jnp.float32)
        + params["fc1_b"], 0.0)
    if nlayers == 2:
        h = jnp.maximum(
            jnp.dot(h.astype(jnp.bfloat16), params["fc2_w"],
                    preferred_element_type=jnp.float32)
            + params["fc2_b"], 0.0)
    res = []
    for t, _n in taskcla:
        w, b = params["heads"][t]
        z = jnp.dot(h.astype(jnp.bfloat16), w,
                    preferred_element_type=jnp.float32) + b
        res.append(jax.nn.log_softmax(z, axis=1))
    return res


if __name__ == "__main__":
    # Small shapes consistent with the module:
    #   inputsize = (ncha=4, size=16, _), nhid=32 -> hidden width 2*dim = 64,
    #   nlayers=2, taskcla = ((0, 10), (1, 5)), batch=2.
    ncha, size = 4, 16
    nhid = 32
    nlayers = 2
    taskcla = ((0, 10), (1, 5))
    B = 2
    in_features = ncha * size * size
    hidden = 2 * nhid

    key = jax.random.PRNGKey(0)
    k_x, k_fc1, k_fc2, k_h0, k_h1 = jax.random.split(key, 5)

    x = jax.random.normal(k_x, (B, ncha, size, size), jnp.float32)

    params = {}
    params["fc1_w"], params["fc1_b"] = init_linear(k_fc1, in_features, hidden)
    params["fc2_w"], params["fc2_b"] = init_linear(k_fc2, hidden, hidden)
    params["heads"] = {
        0: init_linear(k_h0, hidden, taskcla[0][1]),
        1: init_linear(k_h1, hidden, taskcla[1][1]),
    }

    outs = mlp_forward(x, params, nlayers, taskcla)
    outs = [jax.block_until_ready(o) for o in outs]

    refs = ref_forward(x, params, nlayers, taskcla)
    for o, r, (t, n) in zip(outs, refs, taskcla):
        assert o.shape == (B, n), (o.shape, (B, n))
        err = float(jnp.max(jnp.abs(o - r)))
        assert jnp.allclose(o, r, atol=2e-3, rtol=2e-3), (t, err)

    print("KERNEL_OK")
</pallas_src>

<mosaic_0001>
module attributes {stable_mosaic.version = 11 : i64} {
  func.func @kernel(%arg0: i32, %arg1: memref<8x1024xf32, #tpu.memory_space<vmem>>, %arg2: memref<1024x64xbf16, #tpu.memory_space<vmem>>, %arg3: memref<1x64xf32, #tpu.memory_space<vmem>>, %arg4: memref<64x64xbf16, #tpu.memory_space<vmem>>, %arg5: memref<1x64xf32, #tpu.memory_space<vmem>>, %arg6: memref<64x128xbf16, #tpu.memory_space<vmem>>, %arg7: memref<1x128xf32, #tpu.memory_space<vmem>>, %arg8: memref<8x128xf32, #tpu.memory_space<vmem>>) attributes {dimension_semantics = [#tpu.dimension_semantics<parallel>], iteration_bounds = array<i64: 1>, scalar_prefetch = 0 : i64, scratch_operands = 0 : i64, tpu.core_type = #tpu.core_type<tc>, window_params = [{transform_indices = @transform_0, window_bounds = array<i64: 8, 1024>}, {pipeline_mode = #tpu.pipeline_mode<synchronous>, transform_indices = @transform_1, window_bounds = array<i64: 1024, 64>}, {pipeline_mode = #tpu.pipeline_mode<synchronous>, transform_indices = @transform_2, window_bounds = array<i64: 1, 64>}, {pipeline_mode = #tpu.pipeline_mode<synchronous>, transform_indices = @transform_3, window_bounds = array<i64: 64, 64>}, {pipeline_mode = #tpu.pipeline_mode<synchronous>, transform_indices = @transform_4, window_bounds = array<i64: 1, 64>}, {pipeline_mode = #tpu.pipeline_mode<synchronous>, transform_indices = @transform_5, window_bounds = array<i64: 64, 128>}, {pipeline_mode = #tpu.pipeline_mode<synchronous>, transform_indices = @transform_6, window_bounds = array<i64: 1, 128>}, {transform_indices = @transform_7, window_bounds = array<i64: 8, 128>}]} {
    %c0 = arith.constant 0 : index
    %c0_0 = arith.constant 0 : index
    %0 = vector.load %arg1[%c0, %c0_0] : memref<8x1024xf32, #tpu.memory_space<vmem>>, vector<8x1024xf32>
    %1 = arith.truncf %0 : vector<8x1024xf32> to vector<8x1024xbf16>
    %c0_1 = arith.constant 0 : index
    %c0_2 = arith.constant 0 : index
    %2 = vector.load %arg2[%c0_1, %c0_2] : memref<1024x64xbf16, #tpu.memory_space<vmem>>, vector<1024x64xbf16>
    %cst = arith.constant dense<0.000000e+00> : vector<8x64xf32>
    %3 = tpu.matmul %1, %2, %cst {dimension_numbers = #tpu.dot_dimension_numbers<[1], [0], [0], [1], [0, 0, 1, 1], [], []>} : vector<8x1024xbf16>, vector<1024x64xbf16>, vector<8x64xf32> -> vector<8x64xf32>
    %c0_3 = arith.constant 0 : index
    %c0_4 = arith.constant 0 : index
    %4 = vector.load %arg3[%c0_3, %c0_4] : memref<1x64xf32, #tpu.memory_space<vmem>>, vector<1x64xf32>
    %5 = vector.broadcast %4 : vector<1x64xf32> to vector<8x64xf32>
    %6 = arith.addf %3, %5 : vector<8x64xf32>
    %cst_5 = arith.constant 0.000000e+00 : f32
    %7 = vector.broadcast %cst_5 : f32 to vector<8x64xf32>
    %8 = arith.maximumf %6, %7 : vector<8x64xf32>
    %9 = arith.truncf %8 : vector<8x64xf32> to vector<8x64xbf16>
    %c0_6 = arith.constant 0 : index
    %c0_7 = arith.constant 0 : index
    %10 = vector.load %arg4[%c0_6, %c0_7] : memref<64x64xbf16, #tpu.memory_space<vmem>>, vector<64x64xbf16>
    %cst_8 = arith.constant dense<0.000000e+00> : vector<8x64xf32>
    %11 = tpu.matmul %9, %10, %cst_8 {dimension_numbers = #tpu.dot_dimension_numbers<[1], [0], [0], [1], [0, 0, 1, 1], [], []>} : vector<8x64xbf16>, vector<64x64xbf16>, vector<8x64xf32> -> vector<8x64xf32>
    %c0_9 = arith.constant 0 : index
    %c0_10 = arith.constant 0 : index
    %12 = vector.load %arg5[%c0_9, %c0_10] : memref<1x64xf32, #tpu.memory_space<vmem>>, vector<1x64xf32>
    %13 = vector.broadcast %12 : vector<1x64xf32> to vector<8x64xf32>
    %14 = arith.addf %11, %13 : vector<8x64xf32>
    %cst_11 = arith.constant 0.000000e+00 : f32
    %15 = vector.broadcast %cst_11 : f32 to vector<8x64xf32>
    %16 = arith.maximumf %14, %15 : vector<8x64xf32>
    %17 = arith.truncf %16 : vector<8x64xf32> to vector<8x64xbf16>
    %c0_12 = arith.constant 0 : index
    %c0_13 = arith.constant 0 : index
    %18 = vector.load %arg6[%c0_12, %c0_13] : memref<64x128xbf16, #tpu.memory_space<vmem>>, vector<64x128xbf16>
    %cst_14 = arith.constant dense<0.000000e+00> : vector<8x128xf32>
    %19 = tpu.matmul %17, %18, %cst_14 {dimension_numbers = #tpu.dot_dimension_numbers<[1], [0], [0], [1], [0, 0, 1, 1], [], []>} : vector<8x64xbf16>, vector<64x128xbf16>, vector<8x128xf32> -> vector<8x128xf32>
    %c0_15 = arith.constant 0 : index
    %c0_16 = arith.constant 0 : index
    %20 = vector.load %arg7[%c0_15, %c0_16] : memref<1x128xf32, #tpu.memory_space<vmem>>, vector<1x128xf32>
    %21 = vector.broadcast %20 : vector<1x128xf32> to vector<8x128xf32>
    %22 = arith.addf %19, %21 : vector<8x128xf32>
    %23 = tpu.iota {dimensions = array<i32: 1>} : vector<8x128xi32>
    %cst_17 = arith.constant 0.000000e+00 : f32
    %24 = vector.broadcast %cst_17 : f32 to vector<8x128xf32>
    %c0_i32 = arith.constant 0 : i32
    %25 = vector.broadcast %c0_i32 : i32 to vector<8x128xi32>
    %26 = arith.cmpi sge, %23, %25 : vector<8x128xi32>
    %c10_i32 = arith.constant 10 : i32
    %27 = vector.broadcast %c10_i32 : i32 to vector<8x128xi32>
    %28 = arith.cmpi slt, %23, %27 : vector<8x128xi32>
    %29 = arith.andi %26, %28 : vector<8x128xi1>
    %cst_18 = arith.constant 0xFF800000 : f32
    %30 = vector.broadcast %cst_18 : f32 to vector<8x128xf32>
    %31 = arith.select %29, %22, %30 : vector<8x128xi1>, vector<8x128xf32>
    %cst_19 = arith.constant dense<0xFF800000> : vector<8xf32>
    %32 = vector.multi_reduction <maximumf>, %31, %cst_19 [1] : vector<8x128xf32> to vector<8xf32>
    %33 = vector.shape_cast %32 : vector<8xf32> to vector<8x1xf32>
    %34 = vector.broadcast %33 : vector<8x1xf32> to vector<8x128xf32>
    %35 = arith.subf %31, %34 : vector<8x128xf32>
    %36 = math.exp %35 : vector<8x128xf32>
    %cst_20 = arith.constant dense<0.000000e+00> : vector<8xf32>
    %37 = vector.multi_reduction <add>, %36, %cst_20 [1] : vector<8x128xf32> to vector<8xf32>
    %38 = vector.shape_cast %37 : vector<8xf32> to vector<8x1xf32>
    %39 = math.log %38 : vector<8x1xf32>
    %40 = arith.addf %33, %39 : vector<8x1xf32>
    %41 = vector.broadcast %40 : vector<8x1xf32> to vector<8x128xf32>
    %42 = arith.subf %22, %41 : vector<8x128xf32>
    %43 = arith.select %29, %42, %24 : vector<8x128xi1>, vector<8x128xf32>
    %c10_i32_21 = arith.constant 10 : i32
    %44 = vector.broadcast %c10_i32_21 : i32 to vector<8x128xi32>
    %45 = arith.cmpi sge, %23, %44 : vector<8x128xi32>
    %c15_i32 = arith.constant 15 : i32
    %46 = vector.broadcast %c15_i32 : i32 to vector<8x128xi32>
    %47 = arith.cmpi slt, %23, %46 : vector<8x128xi32>
    %48 = arith.andi %45, %47 : vector<8x128xi1>
    %cst_22 = arith.constant 0xFF800000 : f32
    %49 = vector.broadcast %cst_22 : f32 to vector<8x128xf32>
    %50 = arith.select %48, %22, %49 : vector<8x128xi1>, vector<8x128xf32>
    %cst_23 = arith.constant dense<0xFF800000> : vector<8xf32>
    %51 = vector.multi_reduction <maximumf>, %50, %cst_23 [1] : vector<8x128xf32> to vector<8xf32>
    %52 = vector.shape_cast %51 : vector<8xf32> to vector<8x1xf32>
    %53 = vector.broadcast %52 : vector<8x1xf32> to vector<8x128xf32>
    %54 = arith.subf %50, %53 : vector<8x128xf32>
    %55 = math.exp %54 : vector<8x128xf32>
    %cst_24 = arith.constant dense<0.000000e+00> : vector<8xf32>
    %56 = vector.multi_reduction <add>, %55, %cst_24 [1] : vector<8x128xf32> to vector<8xf32>
    %57 = vector.shape_cast %56 : vector<8xf32> to vector<8x1xf32>
    %58 = math.log %57 : vector<8x1xf32>
    %59 = arith.addf %52, %58 : vector<8x1xf32>
    %60 = vector.broadcast %59 : vector<8x1xf32> to vector<8x128xf32>
    %61 = arith.subf %22, %60 : vector<8x128xf32>
    %62 = arith.select %48, %61, %43 : vector<8x128xi1>, vector<8x128xf32>
    %c0_25 = arith.constant 0 : index
    %c0_26 = arith.constant 0 : index
    %63 = vector.load %arg8[%c0_25, %c0_26] : memref<8x128xf32, #tpu.memory_space<vmem>>, vector<8x128xf32>
    tpu.vector_store %arg8[%c0_25, %c0_26], %62 {strides = array<i32>} : memref<8x128xf32, #tpu.memory_space<vmem>>, vector<8x128xf32>,
    return
  }
  func.func @transform_0(%arg0: i32) -> (i32, i32) {
    %c0_i32 = arith.constant 0 : i32
    %c0_i32_0 = arith.constant 0 : i32
    return %arg0, %c0_i32 : i32, i32
  }
  func.func @transform_1(%arg0: i32) -> (i32, i32) {
    %c0_i32 = arith.constant 0 : i32
    %c0_i32_0 = arith.constant 0 : i32
    %c0_i32_1 = arith.constant 0 : i32
    return %c0_i32, %c0_i32_0 : i32, i32
  }
  func.func @transform_2(%arg0: i32) -> (i32, i32) {
    %c0_i32 = arith.constant 0 : i32
    %c0_i32_0 = arith.constant 0 : i32
    %c0_i32_1 = arith.constant 0 : i32
    return %c0_i32, %c0_i32_0 : i32, i32
  }
  func.func @transform_3(%arg0: i32) -> (i32, i32) {
    %c0_i32 = arith.constant 0 : i32
    %c0_i32_0 = arith.constant 0 : i32
    %c0_i32_1 = arith.constant 0 : i32
    return %c0_i32, %c0_i32_0 : i32, i32
  }
  func.func @transform_4(%arg0: i32) -> (i32, i32) {
    %c0_i32 = arith.constant 0 : i32
    %c0_i32_0 = arith.constant 0 : i32
    %c0_i32_1 = arith.constant 0 : i32
    return %c0_i32, %c0_i32_0 : i32, i32
  }
  func.func @transform_5(%arg0: i32) -> (i32, i32) {
    %c0_i32 = arith.constant 0 : i32
    %c0_i32_0 = arith.constant 0 : i32
    %c0_i32_1 = arith.constant 0 : i32
    return %c0_i32, %c0_i32_0 : i32, i32
  }
  func.func @transform_6(%arg0: i32) -> (i32, i32) {
    %c0_i32 = arith.constant 0 : i32
    %c0_i32_0 = arith.constant 0 : i32
    %c0_i32_1 = arith.constant 0 : i32
    return %c0_i32, %c0_i32_0 : i32, i32
  }
  func.func @transform_7(%arg0: i32) -> (i32, i32) {
    %c0_i32 = arith.constant 0 : i32
    %c0_i32_0 = arith.constant 0 : i32
    return %arg0, %c0_i32 : i32, i32
  }
}

</mosaic_0001>

<llo_original>
// kernel: mlp_forward.1
$region0: #{mlp_forward.1}
  #allocation0 [shape = 'u32[]', space=smem, size = 0x4, offset = 0x4, fixed_abs, tag = 'smem constant byte address 0x4 - core index']
  #allocation1 [shape = 'u32[72,128]{1,0:T(1,128)}', space=vmem, size = 0x9000, scoped, tag = 'internal scratch']
  %s0 = inlined_call_operand.vmem [shape: f32[8,1024], index: 0, kind: input, shape index: {}]
  %s1 = inlined_call_operand.vmem [shape: bf16[1024,64], index: 1, kind: input, shape index: {}]
  %s2 = inlined_call_operand.vmem [shape: f32[1,64], index: 2, kind: input, shape index: {}]
  %s3 = inlined_call_operand.vmem [shape: bf16[64,64], index: 3, kind: input, shape index: {}]
  %s4 = inlined_call_operand.vmem [shape: f32[1,64], index: 4, kind: input, shape index: {}]
  %s5 = inlined_call_operand.vmem [shape: bf16[64,128], index: 5, kind: input, shape index: {}]
  %s6 = inlined_call_operand.vmem [shape: f32[1,128], index: 6, kind: input, shape index: {}]
  %s7 = inlined_call_operand.vmem [shape: f32[8,128], index: 7, kind: output, shape index: {}]
  %s8 = sld [smem:[#allocation0]]
  $region38: #{mlp_forward.1} parent=0
    _
  %s10 = ssub.s32 1, %s8
  %s11 = scalar_select 0, %s10, %s8
  // Predicated region
  $region2: #{mlp_forward.1} parent=0 // pred_check
    _
  $region3: #{mlp_forward.1} parent=0 // pred_check_branch
    %13 = sbr.rel (0) target = $region5
  $region4: #{mlp_forward.1} parent=0 // pred_region
    _
  $region5: #{mlp_forward.1} parent=0 // pred_fallthru
    _
  // Predicated region
  $region6: #{mlp_forward.1} parent=0 // pred_check
    _
  $region7: #{mlp_forward.1} parent=0 // pred_check_branch
    %15 = sbr.rel (0) target = $region9
  $region8: #{mlp_forward.1} parent=0 // pred_region
    _
  $region9: #{mlp_forward.1} parent=0 // pred_fallthru
    _
  // Predicated region
  $region10: #{mlp_forward.1} parent=0 // pred_check
    _
  $region11: #{mlp_forward.1} parent=0 // pred_check_branch
    %17 = sbr.rel (0) target = $region13
  $region12: #{mlp_forward.1} parent=0 // pred_region
    _
  $region13: #{mlp_forward.1} parent=0 // pred_fallthru
    _
  // Predicated region
  $region14: #{mlp_forward.1} parent=0 // pred_check
    _
  $region15: #{mlp_forward.1} parent=0 // pred_check_branch
    %19 = sbr.rel (0) target = $region17
  $region16: #{mlp_forward.1} parent=0 // pred_region
    _
  $region17: #{mlp_forward.1} parent=0 // pred_fallthru
    _
  // Predicated region
  $region18: #{mlp_forward.1} parent=0 // pred_check
    _
  $region19: #{mlp_forward.1} parent=0 // pred_check_branch
    %21 = sbr.rel (0) target = $region21
  $region20: #{mlp_forward.1} parent=0 // pred_region
    _
  $region21: #{mlp_forward.1} parent=0 // pred_fallthru
    _
  // Predicated region
  $region22: #{mlp_forward.1} parent=0 // pred_check
    _
  $region23: #{mlp_forward.1} parent=0 // pred_check_branch
    %23 = sbr.rel (0) target = $region25
  $region24: #{mlp_forward.1} parent=0 // pred_region
    _
  $region25: #{mlp_forward.1} parent=0 // pred_fallthru
    _
  // Predicated region
  $region26: #{mlp_forward.1} parent=0 // pred_check
    _
  $region27: #{mlp_forward.1} parent=0 // pred_check_branch
    %25 = sbr.rel (0) target = $region29
  $region28: #{mlp_forward.1} parent=0 // pred_region
    _
  $region29: #{mlp_forward.1} parent=0 // pred_fallthru
    _
  %v27 = vld [vmem:[%s0] sm:$0xff]
  %v28 = vld [vmem:[%s0 + $0x8] sm:$0xff]
  %v29 = vld [vmem:[%s0 + $0x10] sm:$0xff]
  %v30 = vld [vmem:[%s0 + $0x18] sm:$0xff]
  %v31 = vld [vmem:[%s0 + $0x20] sm:$0xff]
  %v32 = vld [vmem:[%s0 + $0x28] sm:$0xff]
  %v33 = vld [vmem:[%s0 + $0x30] sm:$0xff]
  %v34 = vld [vmem:[%s0 + $0x38] sm:$0xff]
  %v35 = vpack.c.bf16 %v27, %v27
  %v36 = vpack.c.bf16 %v28, %v28
  %v37 = vpack.c.bf16 %v29, %v29
  %v38 = vpack.c.bf16 %v30, %v30
  %v39 = vpack.c.bf16 %v31, %v31
  %v40 = vpack.c.bf16 %v32, %v32
  %v41 = vpack.c.bf16 %v33, %v33
  %v42 = vpack.c.bf16 %v34, %v34
  %v43 = vld [vmem:[%s1] sm:$0xf]
  %v44 = vld [vmem:[%s1 + $0x4] sm:$0xf]
  %v45 = vld [vmem:[%s1 + $0x8] sm:$0xf]
  %v46 = vld [vmem:[%s1 + $0xc] sm:$0xf]
  %v47 = vld [vmem:[%s1 + $0x10] sm:$0xf]
  %v48 = vld [vmem:[%s1 + $0x14] sm:$0xf]
  %v49 = vld [vmem:[%s1 + $0x18] sm:$0xf]
  %v50 = vld [vmem:[%s1 + $0x1c] sm:$0xf]
  %v51 = vld [vmem:[%s1 + $0x20] sm:$0xf]
  %v52 = vld [vmem:[%s1 + $0x24] sm:$0xf]
  %v53 = vld [vmem:[%s1 + $0x28] sm:$0xf]
  %v54 = vld [vmem:[%s1 + $0x2c] sm:$0xf]
  %v55 = vld [vmem:[%s1 + $0x30] sm:$0xf]
  %v56 = vld [vmem:[%s1 + $0x34] sm:$0xf]
  %v57 = vld [vmem:[%s1 + $0x38] sm:$0xf]
  %v58 = vld [vmem:[%s1 + $0x3c] sm:$0xf]
  %v59 = vld [vmem:[%s1 + $0x40] sm:$0xf]
  %v60 = vld [vmem:[%s1 + $0x44] sm:$0xf]
  %v61 = vld [vmem:[%s1 + $0x48] sm:$0xf]
  %v62 = vld [vmem:[%s1 + $0x4c] sm:$0xf]
  %v63 = vld [vmem:[%s1 + $0x50] sm:$0xf]
  %v64 = vld [vmem:[%s1 + $0x54] sm:$0xf]
  %v65 = vld [vmem:[%s1 + $0x58] sm:$0xf]
  %v66 = vld [vmem:[%s1 + $0x5c] sm:$0xf]
  %v67 = vld [vmem:[%s1 + $0x60] sm:$0xf]
  %v68 = vld [vmem:[%s1 + $0x64] sm:$0xf]
  %v69 = vld [vmem:[%s1 + $0x68] sm:$0xf]
  %v70 = vld [vmem:[%s1 + $0x6c] sm:$0xf]
  %v71 = vld [vmem:[%s1 + $0x70] sm:$0xf]
  %v72 = vld [vmem:[%s1 + $0x74] sm:$0xf]
  %v73 = vld [vmem:[%s1 + $0x78] sm:$0xf]
  %v74 = vld [vmem:[%s1 + $0x7c] sm:$0xf]
  %v75 = vld [vmem:[%s1 + $0x80] sm:$0xf]
  %v76 = vld [vmem:[%s1 + $0x84] sm:$0xf]
  %v77 = vld [vmem:[%s1 + $0x88] sm:$0xf]
  %v78 = vld [vmem:[%s1 + $0x8c] sm:$0xf]
  %v79 = vld [vmem:[%s1 + $0x90] sm:$0xf]
  %v80 = vld [vmem:[%s1 + $0x94] sm:$0xf]
  %v81 = vld [vmem:[%s1 + $0x98] sm:$0xf]
  %v82 = vld [vmem:[%s1 + $0x9c] sm:$0xf]
  %v83 = vld [vmem:[%s1 + $0xa0] sm:$0xf]
  %v84 = vld [vmem:[%s1 + $0xa4] sm:$0xf]
  %v85 = vld [vmem:[%s1 + $0xa8] sm:$0xf]
  %v86 = vld [vmem:[%s1 + $0xac] sm:$0xf]
  %v87 = vld [vmem:[%s1 + $0xb0] sm:$0xf]
  %v88 = vld [vmem:[%s1 + $0xb4] sm:$0xf]
  %v89 = vld [vmem:[%s1 + $0xb8] sm:$0xf]
  %v90 = vld [vmem:[%s1 + $0xbc] sm:$0xf]
  %v91 = vld [vmem:[%s1 + $0xc0] sm:$0xf]
  %v92 = vld [vmem:[%s1 + $0xc4] sm:$0xf]
  %v93 = vld [vmem:[%s1 + $0xc8] sm:$0xf]
  %v94 = vld [vmem:[%s1 + $0xcc] sm:$0xf]
  %v95 = vld [vmem:[%s1 + $0xd0] sm:$0xf]
  %v96 = vld [vmem:[%s1 + $0xd4] sm:$0xf]
  %v97 = vld [vmem:[%s1 + $0xd8] sm:$0xf]
  %v98 = vld [vmem:[%s1 + $0xdc] sm:$0xf]
  %v99 = vld [vmem:[%s1 + $0xe0] sm:$0xf]
  %v100 = vld [vmem:[%s1 + $0xe4] sm:$0xf]
  %v101 = vld [vmem:[%s1 + $0xe8] sm:$0xf]
  %v102 = vld [vmem:[%s1 + $0xec] sm:$0xf]
  %v103 = vld [vmem:[%s1 + $0xf0] sm:$0xf]
  %v104 = vld [vmem:[%s1 + $0xf4] sm:$0xf]
  %v105 = vld [vmem:[%s1 + $0xf8] sm:$0xf]
  %v106 = vld [vmem:[%s1 + $0xfc] sm:$0xf]
  %v107 = vld [vmem:[%s1 + $0x100] sm:$0xf]
  %v108 = vld [vmem:[%s1 + $0x104] sm:$0xf]
  %v109 = vld [vmem:[%s1 + $0x108] sm:$0xf]
  %v110 = vld [vmem:[%s1 + $0x10c] sm:$0xf]
  %v111 = vld [vmem:[%s1 + $0x110] sm:$0xf]
  %v112 = vld [vmem:[%s1 + $0x114] sm:$0xf]
  %v113 = vld [vmem:[%s1 + $0x118] sm:$0xf]
  %v114 = vld [vmem:[%s1 + $0x11c] sm:$0xf]
  %v115 = vld [vmem:[%s1 + $0x120] sm:$0xf]
  %v116 = vld [vmem:[%s1 + $0x124] sm:$0xf]
  %v117 = vld [vmem:[%s1 + $0x128] sm:$0xf]
  %v118 = vld [vmem:[%s1 + $0x12c] sm:$0xf]
  %v119 = vld [vmem:[%s1 + $0x130] sm:$0xf]
  %v120 = vld [vmem:[%s1 + $0x134] sm:$0xf]
  %v121 = vld [vmem:[%s1 + $0x138] sm:$0xf]
  %v122 = vld [vmem:[%s1 + $0x13c] sm:$0xf]
  %v123 = vld [vmem:[%s1 + $0x140] sm:$0xf]
  %v124 = vld [vmem:[%s1 + $0x144] sm:$0xf]
  %v125 = vld [vmem:[%s1 + $0x148] sm:$0xf]
  %v126 = vld [vmem:[%s1 + $0x14c] sm:$0xf]
  %v127 = vld [vmem:[%s1 + $0x150] sm:$0xf]
  %v128 = vld [vmem:[%s1 + $0x154] sm:$0xf]
  %v129 = vld [vmem:[%s1 + $0x158] sm:$0xf]
  %v130 = vld [vmem:[%s1 + $0x15c] sm:$0xf]
  %v131 = vld [vmem:[%s1 + $0x160] sm:$0xf]
  %v132 = vld [vmem:[%s1 + $0x164] sm:$0xf]
  %v133 = vld [vmem:[%s1 + $0x168] sm:$0xf]
  %v134 = vld [vmem:[%s1 + $0x16c] sm:$0xf]
  %v135 = vld [vmem:[%s1 + $0x170] sm:$0xf]
  %v136 = vld [vmem:[%s1 + $0x174] sm:$0xf]
  %v137 = vld [vmem:[%s1 + $0x178] sm:$0xf]
  %v138 = vld [vmem:[%s1 + $0x17c] sm:$0xf]
  %v139 = vld [vmem:[%s1 + $0x180] sm:$0xf]
  %v140 = vld [vmem:[%s1 + $0x184] sm:$0xf]
  %v141 = vld [vmem:[%s1 + $0x188] sm:$0xf]
  %v142 = vld [vmem:[%s1 + $0x18c] sm:$0xf]
  %v143 = vld [vmem:[%s1 + $0x190] sm:$0xf]
  %v144 = vld [vmem:[%s1 + $0x194] sm:$0xf]
  %v145 = vld [vmem:[%s1 + $0x198] sm:$0xf]
  %v146 = vld [vmem:[%s1 + $0x19c] sm:$0xf]
  %v147 = vld [vmem:[%s1 + $0x1a0] sm:$0xf]
  %v148 = vld [vmem:[%s1 + $0x1a4] sm:$0xf]
  %v149 = vld [vmem:[%s1 + $0x1a8] sm:$0xf]
  %v150 = vld [vmem:[%s1 + $0x1ac] sm:$0xf]
  %v151 = vld [vmem:[%s1 + $0x1b0] sm:$0xf]
  %v152 = vld [vmem:[%s1 + $0x1b4] sm:$0xf]
  %v153 = vld [vmem:[%s1 + $0x1b8] sm:$0xf]
  %v154 = vld [vmem:[%s1 + $0x1bc] sm:$0xf]
  %v155 = vld [vmem:[%s1 + $0x1c0] sm:$0xf]
  %v156 = vld [vmem:[%s1 + $0x1c4] sm:$0xf]
  %v157 = vld [vmem:[%s1 + $0x1c8] sm:$0xf]
  %v158 = vld [vmem:[%s1 + $0x1cc] sm:$0xf]
  %v159 = vld [vmem:[%s1 + $0x1d0] sm:$0xf]
  %v160 = vld [vmem:[%s1 + $0x1d4] sm:$0xf]
  %v161 = vld [vmem:[%s1 + $0x1d8] sm:$0xf]
  %v162 = vld [vmem:[%s1 + $0x1dc] sm:$0xf]
  %v163 = vld [vmem:[%s1 + $0x1e0] sm:$0xf]
  %v164 = vld [vmem:[%s1 + $0x1e4] sm:$0xf]
  %v165 = vld [vmem:[%s1 + $0x1e8] sm:$0xf]
  %v166 = vld [vmem:[%s1 + $0x1ec] sm:$0xf]
  %v167 = vld [vmem:[%s1 + $0x1f0] sm:$0xf]
  %v168 = vld [vmem:[%s1 + $0x1f4] sm:$0xf]
  %v169 = vld [vmem:[%s1 + $0x1f8] sm:$0xf]
  %v170 = vld [vmem:[%s1 + $0x1fc] sm:$0xf]
  %v171 = vld [vmem:[%s2] sm:$0x1]
  %v173 = vperm.slane %v171, 0
  %v303 = vunpack.c.l.b16 %v43
  %v304 = vunpack.c.l.b16 %v44
  %v305 = vunpack.c.l.b16 %v45
  %v306 = vunpack.c.l.b16 %v46
  %v307 = vunpack.c.l.b16 %v47
  %v308 = vunpack.c.l.b16 %v48
  %v309 = vunpack.c.l.b16 %v49
  %v310 = vunpack.c.l.b16 %v50
  %v311 = vunpack.c.l.b16 %v51
  %v312 = vunpack.c.l.b16 %v52
  %v313 = vunpack.c.l.b16 %v53
  %v314 = vunpack.c.l.b16 %v54
  %v315 = vunpack.c.l.b16 %v55
  %v316 = vunpack.c.l.b16 %v56
  %v317 = vunpack.c.l.b16 %v57
  %v318 = vunpack.c.l.b16 %v58
  %v319 = vunpack.c.l.b16 %v59
  %v320 = vunpack.c.l.b16 %v60
  %v321 = vunpack.c.l.b16 %v61
  %v322 = vunpack.c.l.b16 %v62
  %v323 = vunpack.c.l.b16 %v63
  %v324 = vunpack.c.l.b16 %v64
  %v325 = vunpack.c.l.b16 %v65
  %v326 = vunpack.c.l.b16 %v66
  %v327 = vunpack.c.l.b16 %v67
  %v328 = vunpack.c.l.b16 %v68
  %v329 = vunpack.c.l.b16 %v69
  %v330 = vunpack.c.l.b16 %v70
  %v331 = vunpack.c.l.b16 %v71
  %v332 = vunpack.c.l.b16 %v72
  %v333 = vunpack.c.l.b16 %v73
  %v334 = vunpack.c.l.b16 %v74
  %v335 = vunpack.c.l.b16 %v75
  %v336 = vunpack.c.l.b16 %v76
  %v337 = vunpack.c.l.b16 %v77
  %v338 = vunpack.c.l.b16 %v78
  %v339 = vunpack.c.l.b16 %v79
  %v340 = vunpack.c.l.b16 %v80
  %v341 = vunpack.c.l.b16 %v81
  %v342 = vunpack.c.l.b16 %v82
  %v343 = vunpack.c.l.b16 %v83
  %v344 = vunpack.c.l.b16 %v84
  %v345 = vunpack.c.l.b16 %v85
  %v346 = vunpack.c.l.b16 %v86
  %v347 = vunpack.c.l.b16 %v87
  %v348 = vunpack.c.l.b16 %v88
  %v349 = vunpack.c.l.b16 %v89
  %v350 = vunpack.c.l.b16 %v90
  %v351 = vunpack.c.l.b16 %v91
  %v352 = vunpack.c.l.b16 %v92
  %v353 = vunpack.c.l.b16 %v93
  %v354 = vunpack.c.l.b16 %v94
  %v355 = vunpack.c.l.b16 %v95
  %v356 = vunpack.c.l.b16 %v96
  %v357 = vunpack.c.l.b16 %v97
  %v358 = vunpack.c.l.b16 %v98
  %v359 = vunpack.c.l.b16 %v99
  %v360 = vunpack.c.l.b16 %v100
  %v361 = vunpack.c.l.b16 %v101
  %v362 = vunpack.c.l.b16 %v102
  %v363 = vunpack.c.l.b16 %v103
  %v364 = vunpack.c.l.b16 %v104
  %v365 = vunpack.c.l.b16 %v105
  %v366 = vunpack.c.l.b16 %v106
  %v367 = vunpack.c.l.b16 %v107
  %v368 = vunpack.c.l.b16 %v108
  %v369 = vunpack.c.l.b16 %v109
  %v370 = vunpack.c.l.b16 %v110
  %v371 = vunpack.c.l.b16 %v111
  %v372 = vunpack.c.l.b16 %v112
  %v373 = vunpack.c.l.b16 %v113
  %v374 = vunpack.c.l.b16 %v114
  %v375 = vunpack.c.l.b16 %v115
  %v376 = vunpack.c.l.b16 %v116
  %v377 = vunpack.c.l.b16 %v117
  %v378 = vunpack.c.l.b16 %v118
  %v379 = vunpack.c.l.b16 %v119
  %v380 = vunpack.c.l.b16 %v120
  %v381 = vunpack.c.l.b16 %v121
  %v382 = vunpack.c.l.b16 %v122
  %v383 = vunpack.c.l.b16 %v123
  %v384 = vunpack.c.l.b16 %v124
  %v385 = vunpack.c.l.b16 %v125
  %v386 = vunpack.c.l.b16 %v126
  %v387 = vunpack.c.l.b16 %v127
  %v388 = vunpack.c.l.b16 %v128
  %v389 = vunpack.c.l.b16 %v129
  %v390 = vunpack.c.l.b16 %v130
  %v391 = vunpack.c.l.b16 %v131
  %v392 = vunpack.c.l.b16 %v132
  %v393 = vunpack.c.l.b16 %v133
  %v394 = vunpack.c.l.b16 %v134
  %v395 = vunpack.c.l.b16 %v135
  %v396 = vunpack.c.l.b16 %v136
  %v397 = vunpack.c.l.b16 %v137
  %v398 = vunpack.c.l.b16 %v138
  %v399 = vunpack.c.l.b16 %v139
  %v400 = vunpack.c.l.b16 %v140
  %v401 = vunpack.c.l.b16 %v141
  %v402 = vunpack.c.l.b16 %v142
  %v403 = vunpack.c.l.b16 %v143
  %v404 = vunpack.c.l.b16 %v144
  %v405 = vunpack.c.l.b16 %v145
  %v406 = vunpack.c.l.b16 %v146
  %v407 = vunpack.c.l.b16 %v147
  %v408 = vunpack.c.l.b16 %v148
  %v409 = vunpack.c.l.b16 %v149
  %v410 = vunpack.c.l.b16 %v150
  %v411 = vunpack.c.l.b16 %v151
  %v412 = vunpack.c.l.b16 %v152
  %v413 = vunpack.c.l.b16 %v153
  %v414 = vunpack.c.l.b16 %v154
  %v415 = vunpack.c.l.b16 %v155
  %v416 = vunpack.c.l.b16 %v156
  %v417 = vunpack.c.l.b16 %v157
  %v418 = vunpack.c.l.b16 %v158
  %v419 = vunpack.c.l.b16 %v159
  %v420 = vunpack.c.l.b16 %v160
  %v421 = vunpack.c.l.b16 %v161
  %v422 = vunpack.c.l.b16 %v162
  %v423 = vunpack.c.l.b16 %v163
  %v424 = vunpack.c.l.b16 %v164
  %v425 = vunpack.c.l.b16 %v165
  %v426 = vunpack.c.l.b16 %v166
  %v427 = vunpack.c.l.b16 %v167
  %v428 = vunpack.c.l.b16 %v168
  %v429 = vunpack.c.l.b16 %v169
  %v430 = vunpack.c.l.b16 %v170
  %v431 = vpack.c.b16 %v304, %v303
  %v432 = vpack.c.b16 %v306, %v305
  %v433 = vpack.c.b16 %v308, %v307
  %v434 = vpack.c.b16 %v310, %v309
  %v435 = vpack.c.b16 %v312, %v311
  %v436 = vpack.c.b16 %v314, %v313
  %v437 = vpack.c.b16 %v316, %v315
  %v438 = vpack.c.b16 %v318, %v317
  %v439 = vpack.c.b16 %v320, %v319
  %v440 = vpack.c.b16 %v322, %v321
  %v441 = vpack.c.b16 %v324, %v323
  %v442 = vpack.c.b16 %v326, %v325
  %v443 = vpack.c.b16 %v328, %v327
  %v444 = vpack.c.b16 %v330, %v329
  %v445 = vpack.c.b16 %v332, %v331
  %v446 = vpack.c.b16 %v334, %v333
  %v447 = vpack.c.b16 %v336, %v335
  %v448 = vpack.c.b16 %v338, %v337
  %v449 = vpack.c.b16 %v340, %v339
  %v450 = vpack.c.b16 %v342, %v341
  %v451 = vpack.c.b16 %v344, %v343
  %v452 = vpack.c.b16 %v346, %v345
  %v453 = vpack.c.b16 %v348, %v347
  %v454 = vpack.c.b16 %v350, %v349
  %v455 = vpack.c.b16 %v352, %v351
  %v456 = vpack.c.b16 %v354, %v353
  %v457 = vpack.c.b16 %v356, %v355
  %v458 = vpack.c.b16 %v358, %v357
  %v459 = vpack.c.b16 %v360, %v359
  %v460 = vpack.c.b16 %v362, %v361
  %v461 = vpack.c.b16 %v364, %v363
  %v462 = vpack.c.b16 %v366, %v365
  %v463 = vpack.c.b16 %v368, %v367
  %v464 = vpack.c.b16 %v370, %v369
  %v465 = vpack.c.b16 %v372, %v371
  %v466 = vpack.c.b16 %v374, %v373
  %v467 = vpack.c.b16 %v376, %v375
  %v468 = vpack.c.b16 %v378, %v377
  %v469 = vpack.c.b16 %v380, %v379
  %v470 = vpack.c.b16 %v382, %v381
  %v471 = vpack.c.b16 %v384, %v383
  %v472 = vpack.c.b16 %v386, %v385
  %v473 = vpack.c.b16 %v388, %v387
  %v474 = vpack.c.b16 %v390, %v389
  %v475 = vpack.c.b16 %v392, %v391
  %v476 = vpack.c.b16 %v394, %v393
  %v477 = vpack.c.b16 %v396, %v395
  %v478 = vpack.c.b16 %v398, %v397
  %v479 = vpack.c.b16 %v400, %v399
  %v480 = vpack.c.b16 %v402, %v401
  %v481 = vpack.c.b16 %v404, %v403
  %v482 = vpack.c.b16 %v406, %v405
  %v483 = vpack.c.b16 %v408, %v407
  %v484 = vpack.c.b16 %v410, %v409
  %v485 = vpack.c.b16 %v412, %v411
  %v486 = vpack.c.b16 %v414, %v413
  %v487 = vpack.c.b16 %v416, %v415
  %v488 = vpack.c.b16 %v418, %v417
  %v489 = vpack.c.b16 %v420, %v419
  %v490 = vpack.c.b16 %v422, %v421
  %v491 = vpack.c.b16 %v424, %v423
  %v492 = vpack.c.b16 %v426, %v425
  %v493 = vpack.c.b16 %v428, %v427
  %v494 = vpack.c.b16 %v430, %v429
  %559 = vmatpush.bf16.msra.mxu0 %v438
  %560 = vmatpush.bf16.msra.mxu0 %v437
  %561 = vmatpush.bf16.msra.mxu0 %v436
  %562 = vmatpush.bf16.msra.mxu0 %v435
  %563 = vmatpush.bf16.msra.mxu0 %v434
  %564 = vmatpush.bf16.msra.mxu0 %v433
  %565 = vmatpush.bf16.msra.mxu0 %v432
  %566 = vmatpush.bf16.msra.mxu0 %v431
  %567 = vmatmul.bf16.gmra.mxu0 %v35
  %v568 = vpop.f32.mrf.mxu0
  %v569 = vadd.f32 %v173, %v568
  %v570 = vpop.f32.mrf.mxu0
  %571 = vdwg.mxu0
  %572 = vmatpush.bf16.msra.mxu0 %v446
  %573 = vmatpush.bf16.msra.mxu0 %v445
  %574 = vmatpush.bf16.msra.mxu0 %v444
  %575 = vmatpush.bf16.msra.mxu0 %v443
  %576 = vmatpush.bf16.msra.mxu0 %v442
  %577 = vmatpush.bf16.msra.mxu0 %v441
  %578 = vmatpush.bf16.msra.mxu0 %v440
  %579 = vmatpush.bf16.msra.mxu0 %v439
  %580 = vmatmul.bf16.gmra.mxu0 %v36
  %v581 = vpop.f32.mrf.mxu0
  %v582 = vadd.f32 %v569, %v581
  %v583 = vpop.f32.mrf.mxu0
  %584 = vdwg.mxu0
  %585 = vmatpush.bf16.msra.mxu0 %v454
  %586 = vmatpush.bf16.msra.mxu0 %v453
  %587 = vmatpush.bf16.msra.mxu0 %v452
  %588 = vmatpush.bf16.msra.mxu0 %v451
  %589 = vmatpush.bf16.msra.mxu0 %v450
  %590 = vmatpush.bf16.msra.mxu0 %v449
  %591 = vmatpush.bf16.msra.mxu0 %v448
  %592 = vmatpush.bf16.msra.mxu0 %v447
  %593 = vmatmul.bf16.gmra.mxu0 %v37
  %v594 = vpop.f32.mrf.mxu0
  %v595 = vadd.f32 %v582, %v594
  %v596 = vpop.f32.mrf.mxu0
  %597 = vdwg.mxu0
  %598 = vmatpush.bf16.msra.mxu0 %v462
  %599 = vmatpush.bf16.msra.mxu0 %v461
  %600 = vmatpush.bf16.msra.mxu0 %v460
  %601 = vmatpush.bf16.msra.mxu0 %v459
  %602 = vmatpush.bf16.msra.mxu0 %v458
  %603 = vmatpush.bf16.msra.mxu0 %v457
  %604 = vmatpush.bf16.msra.mxu0 %v456
  %605 = vmatpush.bf16.msra.mxu0 %v455
  %606 = vmatmul.bf16.gmra.mxu0 %v38
  %v607 = vpop.f32.mrf.mxu0
  %v608 = vadd.f32 %v595, %v607
  %v609 = vpop.f32.mrf.mxu0
  %610 = vdwg.mxu0
  %611 = vmatpush.bf16.msra.mxu0 %v470
  %612 = vmatpush.bf16.msra.mxu0 %v469
  %613 = vmatpush.bf16.msra.mxu0 %v468
  %614 = vmatpush.bf16.msra.mxu0 %v467
  %615 = vmatpush.bf16.msra.mxu0 %v466
  %616 = vmatpush.bf16.msra.mxu0 %v465
  %617 = vmatpush.bf16.msra.mxu0 %v464
  %618 = vmatpush.bf16.msra.mxu0 %v463
  %619 = vmatmul.bf16.gmra.mxu0 %v39
  %v620 = vpop.f32.mrf.mxu0
  %v621 = vadd.f32 %v608, %v620
  %v622 = vpop.f32.mrf.mxu0
  %623 = vdwg.mxu0
  %624 = vmatpush.bf16.msra.mxu0 %v478
  %625 = vmatpush.bf16.msra.mxu0 %v477
  %626 = vmatpush.bf16.msra.mxu0 %v476
  %627 = vmatpush.bf16.msra.mxu0 %v475
  %628 = vmatpush.bf16.msra.mxu0 %v474
  %629 = vmatpush.bf16.msra.mxu0 %v473
  %630 = vmatpush.bf16.msra.mxu0 %v472
  %631 = vmatpush.bf16.msra.mxu0 %v471
  %632 = vmatmul.bf16.gmra.mxu0 %v40
  %v633 = vpop.f32.mrf.mxu0
  %v634 = vadd.f32 %v621, %v633
  %v635 = vpop.f32.mrf.mxu0
  %636 = vdwg.mxu0
  %637 = vmatpush.bf16.msra.mxu0 %v486
  %638 = vmatpush.bf16.msra.mxu0 %v485
  %639 = vmatpush.bf16.msra.mxu0 %v484
  %640 = vmatpush.bf16.msra.mxu0 %v483
  %641 = vmatpush.bf16.msra.mxu0 %v482
  %642 = vmatpush.bf16.msra.mxu0 %v481
  %643 = vmatpush.bf16.msra.mxu0 %v480
  %644 = vmatpush.bf16.msra.mxu0 %v479
  %645 = vmatmul.bf16.gmra.mxu0 %v41
  %v646 = vpop.f32.mrf.mxu0
  %v647 = vadd.f32 %v634, %v646
  %v648 = vpop.f32.mrf.mxu0
  %649 = vdwg.mxu0
  %650 = vmatpush.bf16.msra.mxu0 %v494
  %651 = vmatpush.bf16.msra.mxu0 %v493
  %652 = vmatpush.bf16.msra.mxu0 %v492
  %653 = vmatpush.bf16.msra.mxu0 %v491
  %654 = vmatpush.bf16.msra.mxu0 %v490
  %655 = vmatpush.bf16.msra.mxu0 %v489
  %656 = vmatpush.bf16.msra.mxu0 %v488
  %657 = vmatpush.bf16.msra.mxu0 %v487
  %658 = vmatmul.bf16.gmra.mxu0 %v42
  %v659 = vpop.f32.mrf.mxu0
  %v660 = vadd.f32 %v647, %v659
  %v661 = vpop.f32.mrf.mxu0
  %662 = vdwg.mxu0
  %v663 = vmax.f32 %v660, 0.0
  %v664 = vpack.c.bf16 %v663, %v663
  %v665 = vld [vmem:[%s3] sm:$0xf]
  %v666 = vld [vmem:[%s3 + $0x4] sm:$0xf]
  %v667 = vld [vmem:[%s3 + $0x8] sm:$0xf]
  %v668 = vld [vmem:[%s3 + $0xc] sm:$0xf]
  %v669 = vld [vmem:[%s3 + $0x10] sm:$0xf]
  %v670 = vld [vmem:[%s3 + $0x14] sm:$0xf]
  %v671 = vld [vmem:[%s3 + $0x18] sm:$0xf]
  %v672 = vld [vmem:[%s3 + $0x1c] sm:$0xf]
  %v673 = vld [vmem:[%s4] sm:$0x1]
  %v675 = vperm.slane %v673, 0
  %v685 = vunpack.c.l.b16 %v665
  %v686 = vunpack.c.l.b16 %v666
  %v687 = vunpack.c.l.b16 %v667
  %v688 = vunpack.c.l.b16 %v668
  %v689 = vunpack.c.l.b16 %v669
  %v690 = vunpack.c.l.b16 %v670
  %v691 = vunpack.c.l.b16 %v671
  %v692 = vunpack.c.l.b16 %v672
  %v693 = vpack.c.b16 %v686, %v685
  %v694 = vpack.c.b16 %v688, %v687
  %v695 = vpack.c.b16 %v690, %v689
  %v696 = vpack.c.b16 %v692, %v691
  %vm701 = vcmask 523264
  %v703 = vsel %vm701, %v664, 0
  %705 = vmatpush.bf16.msra.mxu0 0
  %706 = vmatpush.bf16.msra.mxu0 0
  %707 = vmatpush.bf16.msra.mxu0 0
  %708 = vmatpush.bf16.msra.mxu0 0
  %709 = vmatpush.bf16.msra.mxu0 %v696
  %710 = vmatpush.bf16.msra.mxu0 %v695
  %711 = vmatpush.bf16.msra.mxu0 %v694
  %712 = vmatpush.bf16.msra.mxu0 %v693
  %713 = vmatmul.bf16.gmra.mxu0 %v703
  %v714 = vpop.f32.mrf.mxu0
  %v715 = vadd.f32 %v675, %v714
  %v716 = vpop.f32.mrf.mxu0
  %717 = vdwg.mxu0
  %v718 = vmax.f32 %v715, 0.0
  %v719 = vpack.c.bf16 %v718, %v718
  %v720 = vld [vmem:[%s5] sm:$0xf]
  %v721 = vld [vmem:[%s5 + $0x4] sm:$0xf]
  %v722 = vld [vmem:[%s5 + $0x8] sm:$0xf]
  %v723 = vld [vmem:[%s5 + $0xc] sm:$0xf]
  %v724 = vld [vmem:[%s5 + $0x10] sm:$0xf]
  %v725 = vld [vmem:[%s5 + $0x14] sm:$0xf]
  %v726 = vld [vmem:[%s5 + $0x18] sm:$0xf]
  %v727 = vld [vmem:[%s5 + $0x1c] sm:$0xf]
  %v728 = vld [vmem:[%s6] sm:$0x1]
  %v730 = vperm.slane %v728, 0
  %v740 = vunpack.c.l.b16 %v720
  %v741 = vunpack.c.l.b16 %v721
  %v742 = vunpack.c.l.b16 %v722
  %v743 = vunpack.c.l.b16 %v723
  %v744 = vunpack.c.l.b16 %v724
  %v745 = vunpack.c.l.b16 %v725
  %v746 = vunpack.c.l.b16 %v726
  %v747 = vunpack.c.l.b16 %v727
  %v748 = vpack.c.b16 %v741, %v740
  %v749 = vpack.c.b16 %v743, %v742
  %v750 = vpack.c.b16 %v745, %v744
  %v751 = vpack.c.b16 %v747, %v746
  %v757 = vsel %vm701, %v719, 0
  %759 = vmatpush.bf16.msra.mxu0 0
  %760 = vmatpush.bf16.msra.mxu0 0
  %761 = vmatpush.bf16.msra.mxu0 0
  %762 = vmatpush.bf16.msra.mxu0 0
  %763 = vmatpush.bf16.msra.mxu0 %v751
  %764 = vmatpush.bf16.msra.mxu0 %v750
  %765 = vmatpush.bf16.msra.mxu0 %v749
  %766 = vmatpush.bf16.msra.mxu0 %v748
  %767 = vmatmul.bf16.gmra.mxu0 %v757
  %v768 = vpop.f32.mrf.mxu0
  %v769 = vadd.f32 %v730, %v768
  %v770 = vpop.f32.mrf.mxu0
  %771 = vdwg.mxu0
  %v772 = vlaneseq
  %v773 = vand.u32 %v772, 127
  %vm774 = vcmp.ge.s32.totalorder %v773, 0
  %vm775 = vcmp.lt.s32.totalorder %v773, 10
  %vm776 = vmand %vm774, %vm775
  %v777 = vsel %vm776, %v769, -inf
  %778 = vmax.xlane.f32.xlu0 %v777
  %v779 = vpop.xlane.xlu0 %778
  %v780 = vsub.f32 %v777, %v779
  %v781 = vmul.f32 %v780, 1.442695
  %v782 = vpow.pop %v781
  %783 = vadd.xlane.f32.xlu0 %v782
  %v784 = vpop.xlane.xlu0 %783
  %v785 = vlog2.pop %v784
  %v786 = vmul.f32 %v785, 0.6931472
  %v787 = vadd.f32 %v779, %v786
  %v788 = vsub.f32 %v769, %v787
  %v789 = vsel %vm776, %v788, 0.0
  %vm790 = vcmp.ge.s32.totalorder %v773, 10
  %vm791 = vcmp.lt.s32.totalorder %v773, 15
  %vm792 = vmand %vm790, %vm791
  %v793 = vsel %vm792, %v769, -inf
  %794 = vmax.xlane.f32.xlu0 %v793
  %v795 = vpop.xlane.xlu0 %794
  %v796 = vsub.f32 %v793, %v795
  %v797 = vmul.f32 %v796, 1.442695
  %v798 = vpow.pop %v797
  %799 = vadd.xlane.f32.xlu0 %v798
  %v800 = vpop.xlane.xlu0 %799
  %v801 = vlog2.pop %v800
  %v802 = vmul.f32 %v801, 0.6931472
  %v803 = vadd.f32 %v795, %v802
  %v804 = vsub.f32 %v769, %v803
  %v805 = vsel %vm792, %v804, %v789
  %806 = vst [vmem:[%s7] sm:$0xff] %v805
  // Predicated region
  $region30: #{mlp_forward.1} parent=0 // pred_check
    _
  $region31: #{mlp_forward.1} parent=0 // pred_check_branch
    %808 = sbr.rel (0) target = $region33
  $region32: #{mlp_forward.1} parent=0 // pred_region
    _
  $region33: #{mlp_forward.1} parent=0 // pred_fallthru
    _
  // Predicated region
  $region34: #{mlp_forward.1} parent=0 // pred_check
    _
  $region35: #{mlp_forward.1} parent=0 // pred_check_branch
    %810 = sbr.rel (0) target = $region37
  $region36: #{mlp_forward.1} parent=0 // pred_region
    _
  $region37: #{mlp_forward.1} parent=0 // pred_fallthru
    _

</llo_original>
